<compile_context>
chip_gen: v5e
topology: v5e:2x2
jax: 0.10.0
libtpu: 0.0.40
codegen_flags: <defaults>
</compile_context>

<pallas_src>
import functools

import jax
import jax.numpy as jnp
from jax.experimental import pallas as pl
from jax.experimental.pallas import tpu as pltpu

LANE = 128


def _unary_kernel(x_ref, o_ref, *, fn):
    # Elementwise hot path: whole VMEM tile through the VPU/EUP.
    o_ref[...] = fn(x_ref[...])


def _sublane_for_dtype(dtype):
    itemsize = jnp.dtype(dtype).itemsize
    return {4: 8, 2: 16, 1: 32}.get(itemsize, 8)


@functools.lru_cache(maxsize=64)
def _build_unary_call(R, C, block_rows, dtype_name, fn):
    dtype = jnp.dtype(dtype_name)
    itemsize = dtype.itemsize
    n = R * C
    grid = (pl.cdiv(R, block_rows),)
    block_bytes = block_rows * C * itemsize
    # in + out, double-buffered = 4x block_bytes; leave headroom, cap for v7x.
    vmem_limit = int(min(64 * 1024 * 1024, max(32 * 1024 * 1024, 6 * block_bytes)))

    kernel = functools.partial(_unary_kernel, fn=fn)
    cost = pl.CostEstimate(
        flops=4 * n,                    # a few VPU ops per element
        transcendentals=n,              # exp in sigmoid
        bytes_accessed=2 * n * itemsize,
    )

    return pl.pallas_call(
        kernel,
        out_shape=jax.ShapeDtypeStruct((R, C), dtype),
        grid_spec=pltpu.PrefetchScalarGridSpec(
            num_scalar_prefetch=0,
            grid=grid,
            in_specs=[pl.BlockSpec((block_rows, C), lambda i: (i, 0))],
            out_specs=pl.BlockSpec((block_rows, C), lambda i: (i, 0)),
        ),
        compiler_params=pltpu.CompilerParams(
            dimension_semantics=("parallel",),   # shards rows across TCs on v7x
            vmem_limit_bytes=vmem_limit,
        ),
        cost_estimate=cost,
    )


def unary_module(x, fn=jax.nn.sigmoid, target_block_bytes=4 * 1024 * 1024):
    """Apply an elementwise unary `fn` to x (any shape) via a Pallas kernel."""
    orig_shape = x.shape
    dtype = x.dtype
    n = x.size
    if n == 0:
        return x

    itemsize = jnp.dtype(dtype).itemsize
    sublane = _sublane_for_dtype(dtype)

    flat = jnp.ravel(x)

    # Lane width C: widest multiple of 128 (<= 8192) that divides n, so no
    # padding / extra HBM copy for aligned sizes. Otherwise pad only up to the
    # next multiple of a modest C (<= C-1 extra elements).
    C = None
    for cand in (8192, 4096, 2048, 1024, 512, 256, 128):
        if n % cand == 0:
            C = cand
            break
    if C is None:
        C = 1024
        n_pad = pl.cdiv(n, C) * C
        flat = jnp.pad(flat, (0, n_pad - n))
    else:
        n_pad = n

    R = n_pad // C
    slab = flat.reshape(R, C)

    # Block rows: as many as fit the target block bytes (multi-MiB tiles to
    # amortize per-grid-step overhead), rounded to a sublane multiple, or the
    # full row extent for small inputs. Never collapses to tiny tiles.
    target_rows = max(1, target_block_bytes // (C * itemsize))
    if R <= target_rows:
        block_rows = R
    else:
        block_rows = max(sublane, (target_rows // sublane) * sublane)
        if block_rows >= R:
            block_rows = R

    call = _build_unary_call(R, C, block_rows, jnp.dtype(dtype).name, fn)
    out_slab = call(slab)

    if n_pad != n:
        out = out_slab.reshape(-1)[:n].reshape(orig_shape)
    else:
        out = out_slab.reshape(orig_shape)
    return out


if __name__ == "__main__":
    key = jax.random.PRNGKey(0)

    # Primary check: NCHW input, small shape consistent with a conv-style
    # diffusion model. UnaryModule(torch.sigmoid)(x) equivalent.
    x = jax.random.normal(key, (2, 4, 16, 16), dtype=jnp.float32)
    y = jax.block_until_ready(unary_module(x, fn=jax.nn.sigmoid))
    ref = jax.nn.sigmoid(x)
    assert y.shape == x.shape and y.dtype == x.dtype
    assert jnp.max(jnp.abs(y - ref)) < 1e-6

    # Multi-block grid path (small tensor, shrunken block budget to exercise
    # the row-tiled, masked-last-block pipeline).
    k1, k2 = jax.random.split(key)
    x2 = jax.random.normal(k1, (16, 16, 32, 32), dtype=jnp.float32)
    y2 = jax.block_until_ready(
        unary_module(x2, fn=jax.nn.sigmoid, target_block_bytes=64 * 1024))
    assert jnp.max(jnp.abs(y2 - jax.nn.sigmoid(x2))) < 1e-6

    # Unaligned size -> minimal-pad + slice-back path.
    x3 = jax.random.normal(k2, (3, 5, 7, 11), dtype=jnp.float32)
    y3 = jax.block_until_ready(unary_module(x3, fn=jax.nn.sigmoid))
    assert y3.shape == x3.shape
    assert jnp.max(jnp.abs(y3 - jax.nn.sigmoid(x3))) < 1e-6

    # bf16 path (16-sublane packing, same lane-dense slab logic).
    x4 = jax.random.normal(key, (2, 8, 16, 16), dtype=jnp.bfloat16)
    y4 = jax.block_until_ready(unary_module(x4, fn=jax.nn.sigmoid))
    assert y4.dtype == jnp.bfloat16
    assert jnp.max(jnp.abs(y4.astype(jnp.float32)
                           - jax.nn.sigmoid(x4).astype(jnp.float32))) < 1e-2

    print("KERNEL_OK")
</pallas_src>

<mosaic_0001>
module attributes {stable_mosaic.version = 11 : i64} {
  func.func @_unary_kernel(%arg0: i32, %arg1: memref<1x2048xf32, #tpu.memory_space<vmem>>, %arg2: memref<1x2048xf32, #tpu.memory_space<vmem>>) attributes {dimension_semantics = [#tpu.dimension_semantics<parallel>], iteration_bounds = array<i64: 1>, scalar_prefetch = 0 : i64, scratch_operands = 0 : i64, tpu.core_type = #tpu.core_type<tc>, window_params = [{transform_indices = @transform_0, window_bounds = array<i64: 1, 2048>}, {transform_indices = @transform_1, window_bounds = array<i64: 1, 2048>}]} {
    %c0 = arith.constant 0 : index
    %c0_0 = arith.constant 0 : index
    %0 = vector.load %arg1[%c0, %c0_0] : memref<1x2048xf32, #tpu.memory_space<vmem>>, vector<1x2048xf32>
    %1 = arith.negf %0 : vector<1x2048xf32>
    %2 = math.exp %1 : vector<1x2048xf32>
    %cst = arith.constant 1.000000e+00 : f32
    %3 = vector.broadcast %cst : f32 to vector<1x2048xf32>
    %4 = arith.addf %3, %2 : vector<1x2048xf32>
    %5 = arith.divf %3, %4 : vector<1x2048xf32>
    %c0_1 = arith.constant 0 : index
    %c0_2 = arith.constant 0 : index
    %6 = vector.load %arg2[%c0_1, %c0_2] : memref<1x2048xf32, #tpu.memory_space<vmem>>, vector<1x2048xf32>
    tpu.vector_store %arg2[%c0_1, %c0_2], %5 {strides = array<i32>} : memref<1x2048xf32, #tpu.memory_space<vmem>>, vector<1x2048xf32>,
    return
  }
  func.func @transform_0(%arg0: i32) -> (i32, i32) {
    %c0_i32 = arith.constant 0 : i32
    %c0_i32_0 = arith.constant 0 : i32
    return %arg0, %c0_i32 : i32, i32
  }
  func.func @transform_1(%arg0: i32) -> (i32, i32) {
    %c0_i32 = arith.constant 0 : i32
    %c0_i32_0 = arith.constant 0 : i32
    return %arg0, %c0_i32 : i32, i32
  }
}

</mosaic_0001>

<llo_original>
// kernel: tpu_custom_call.1
$region0: #{tpu_custom_call.1}
  #allocation0 [shape = 'u32[]', space=smem, size = 0x4, offset = 0x4, fixed_abs, tag = 'smem constant byte address 0x4 - core index']
  #allocation1 [shape = 'u32[72,128]{1,0:T(1,128)}', space=vmem, size = 0x9000, scoped, tag = 'internal scratch']
  %s0 = inlined_call_operand.hbm [shape: f32[1,2048], index: 0, kind: input, shape index: {}]
  %s1 = inlined_call_operand.hbm [shape: f32[1,2048], index: 1, kind: output, shape index: {}]
  %s2 = sld [smem:[#allocation0]]
  $region18: #{tpu_custom_call.1} parent=0
    _
  %s4 = ssub.s32 1, %s2
  %s5 = scalar_select 0, %s4, %s2
  $region1: #{tpu_custom_call.1} parent=0
    #allocation2 [shape = 'u8[8192]{0}', space=vmem, size = 0x2000, scoped, tag = 'input window, operand 0, single buffered']
    #allocation3 [shape = 's32[1]{0}', space=sflag, size = 0x4, scoped, tag = 'scoped memory for tpu_custom_call.1']
    #allocation4 [shape = 's32[1]{0}', space=sflag, size = 0x4, scoped, tag = 'scoped memory for tpu_custom_call.1']
    #allocation5 [shape = 'u8[8192]{0}', space=vmem, size = 0x2000, scoped, tag = 'output window, operand 0, single buffered']
    %6 = vsyncpa [#allocation3], 0
    %7 = vsyncpa [#allocation4], 0
    // Predicated region
    $region2: #{tpu_custom_call.1} parent=1 // pred_check
      _
    $region3: #{tpu_custom_call.1} parent=1 // pred_check_branch
      %9 = sbr.rel (0) target = $region5
    $region4: #{tpu_custom_call.1} parent=1 // pred_region
      %11 = vsyncadd [#allocation3], 0
      %s13 = sshll.u32 %s0, 4
      %s14 = int_to_ptr.hbm [resolvable:$true] %s13
      %s15 = sshll.u32 [#allocation2], 4
      %s16 = int_to_ptr.vmem [resolvable:$true] %s15
      %18 = dma.hbm_to_vmem [thread:$0]  %s14, 256, %s16, [#allocation3]
    $region5: #{tpu_custom_call.1} parent=1 // pred_fallthru
      _
    // Predicated region
    $region6: #{tpu_custom_call.1} parent=1 // pred_check
      _
    $region7: #{tpu_custom_call.1} parent=1 // pred_check_branch
      %20 = sbr.rel (0) target = $region9
    $region8: #{tpu_custom_call.1} parent=1 // pred_region
      %22 = dma.done [#allocation3], 256
    $region9: #{tpu_custom_call.1} parent=1 // pred_fallthru
      _
    %v23 = vld [vmem:[#allocation2] sm:$0xff]
    %v24 = vld [vmem:[#allocation2 + $0x8] sm:$0xff]
    %v25 = vxor.u32 %v23, 2147483648
    %v26 = vxor.u32 %v24, 2147483648
    %v27 = vmul.f32 %v25, 1.442695
    %v28 = vpow.pop %v27
    %v29 = vmul.f32 %v26, 1.442695
    %v30 = vpow.pop %v29
    %v31 = vadd.f32 %v28, 1.0
    %v32 = vadd.f32 %v30, 1.0
    %v33 = vrcp.pop %v31
    %v34 = vmul.f32 %v31, %v33
    %v35 = vsub.f32 1.0, %v34
    %v36 = vmul.f32 %v33, %v35
    %v37 = vadd.f32 %v33, %v36
    %vm38 = vweird.f32 %v31
    %vm39 = vweird.f32 %v33
    %vm40 = vmor %vm38, %vm39
    %v41 = vsel %vm40, %v33, %v37
    %v42 = vand.u32 2147483647, %v31
    %vm43 = vcmp.eq.f32.partialorder %v42, 8.507059e+37
    %v44 = vand.u32 %v31, 2147483648
    %v45 = vor.u32 1.1754944e-38, %v44
    %v46 = vsel %vm43, %v45, %v41
    %v47 = vmul.f32 1.0, %v46
    %v48 = vrcp.pop %v32
    %v49 = vmul.f32 %v32, %v48
    %v50 = vsub.f32 1.0, %v49
    %v51 = vmul.f32 %v48, %v50
    %v52 = vadd.f32 %v48, %v51
    %vm53 = vweird.f32 %v32
    %vm54 = vweird.f32 %v48
    %vm55 = vmor %vm53, %vm54
    %v56 = vsel %vm55, %v48, %v52
    %v57 = vand.u32 2147483647, %v32
    %vm58 = vcmp.eq.f32.partialorder %v57, 8.507059e+37
    %v59 = vand.u32 %v32, 2147483648
    %v60 = vor.u32 1.1754944e-38, %v59
    %v61 = vsel %vm58, %v60, %v56
    %v62 = vmul.f32 1.0, %v61
    %63 = vst [vmem:[#allocation5] sm:$0xff] %v47
    %64 = vst [vmem:[#allocation5 + $0x8] sm:$0xff] %v62
    // Predicated region
    $region10: #{tpu_custom_call.1} parent=1 // pred_check
      _
    $region11: #{tpu_custom_call.1} parent=1 // pred_check_branch
      %66 = sbr.rel (0) target = $region13
    $region12: #{tpu_custom_call.1} parent=1 // pred_region
      %68 = vsyncadd [#allocation4], 0
      %s70 = sshll.u32 [#allocation5], 4
      %s71 = int_to_ptr.vmem [resolvable:$true] %s70
      %s72 = sshll.u32 %s1, 4
      %s73 = int_to_ptr.hbm [resolvable:$true] %s72
      %75 = dma.vmem_to_hbm [thread:$0]  %s71, 256, %s73, [#allocation4]
    $region13: #{tpu_custom_call.1} parent=1 // pred_fallthru
      _
    // Predicated region
    $region14: #{tpu_custom_call.1} parent=1 // pred_check
      _
    $region15: #{tpu_custom_call.1} parent=1 // pred_check_branch
      %77 = sbr.rel (0) target = $region17
    $region16: #{tpu_custom_call.1} parent=1 // pred_region
      %79 = dma.done [#allocation4], 256
    $region17: #{tpu_custom_call.1} parent=1 // pred_fallthru
      _
    %80 = vsyncpa [#allocation3], 1
    %81 = vsyncpa [#allocation4], 1

</llo_original>
